<compile_context>
chip_gen: v5e
topology: v5e:2x2
jax: 0.10.0
libtpu: 0.0.40
codegen_flags: <defaults>
</compile_context>

<pallas_src>
import functools

import jax
import jax.numpy as jnp
import numpy as np
from jax.experimental import pallas as pl
from jax.experimental.pallas import tpu as pltpu


def _decode_tile(x_ref, wt_ref, coef_ref, *, ny, nx):
    """Shared body for one row tile.

    x_ref:    (tm, c)      activations (bf16)
    wt_ref:   (n_pad, c)   conv weight, rows = out-channels (bf16)
    coef_ref: (n_pad, 5)   f32 columns: 0=bias 1=a_lin 2=a_quad 3=a_gx 4=a_gy
    returns raw (n_pad, tm) f32 and decoded y (n_pad, tm) f32.
    """
    tm = x_ref.shape[0]

    # 1x1 conv == per-pixel matmul over channels, "NT" orientation on the MXU
    # (same structure as q @ k.T in flash attention): out (n_pad, tm).
    raw = jax.lax.dot_general(
        wt_ref[...], x_ref[...],
        dimension_numbers=(((1,), (1,)), ((), ())),
        preferred_element_type=jnp.float32)
    raw = raw + coef_ref[:, 0:1]                       # conv bias

    # exact sigmoid, one EUP transcendental (no approx reciprocal).
    s = 0.5 * (jnp.tanh(0.5 * raw) + 1.0)

    # per-pixel grid offsets from the global flattened row index
    # row = (b*ny + y)*nx + x  ->  gx = x - 0.5, gy = y - 0.5.
    # Float divide/floor keeps the lowering trivially supported and exact for
    # any realistic m (< 2^24); avoids vector integer div/mod.
    col0 = (pl.program_id(0) * tm).astype(jnp.float32)
    colf = jax.lax.broadcasted_iota(jnp.int32, (1, tm), 1).astype(jnp.float32) + col0
    npix = float(ny * nx)
    img = jnp.floor((colf + 0.5) / npix)               # batch index
    pixf = colf - img * npix                           # pixel index in image
    gy = jnp.floor((pixf + 0.5) / float(nx))
    gx = pixf - gy * float(nx) - 0.5                   # (1, tm)
    gy = gy - 0.5                                      # (1, tm)

    # y = s*(a_lin + s*a_quad) + gx*a_gx + gy*a_gy reproduces
    #   xy = (2s + grid)*stride, wh = (2s)^2*anchor*stride, conf/cls = s.
    y = s * (coef_ref[:, 1:2] + s * coef_ref[:, 2:3])
    y = y + gx * coef_ref[:, 3:4] + gy * coef_ref[:, 4:5]
    return raw, y


def _detect_kernel(x_ref, wt_ref, coef_ref, raw_ref, y_ref, *, ny, nx):
    raw, y = _decode_tile(x_ref, wt_ref, coef_ref, ny=ny, nx=nx)
    raw_ref[...] = raw       # pre-sigmoid conv output -> module's x[i]
    y_ref[...] = y           # decoded predictions -> z


def _detect_kernel_export(x_ref, wt_ref, coef_ref, y_ref, *, ny, nx):
    # export=True: module only returns cat(z), so skip the raw writeback.
    _, y = _decode_tile(x_ref, wt_ref, coef_ref, ny=ny, nx=nx)
    y_ref[...] = y


def _plan_rows(m, tm_max=2048):
    """Row-tile size: multiple of 128, capped at tm_max, and chosen so the
    1-D grid has >= 2 steps whenever m allows it (dual-TensorCore sharding on
    v7x).  The grid is cdiv(m, tm): no host-side padding of the activations;
    boundary blocks use Pallas' clamped reads / dropped OOB writes."""
    m128 = -(-m // 128) * 128
    tm = min(tm_max, m128)
    if m128 >= 256:
        half = -(-(m128 // 2) // 128) * 128
        tm = min(tm, half)
    return max(tm, 128)


def detect_forward(xs, params, anchors, strides, nc, *, export=False,
                   matmul_dtype=jnp.bfloat16):
    """Inference-mode Detect.forward (training=False).

    xs:      list of NHWC feature maps (bs, ny, nx, C), one per level.
    params:  list of (w (na*no, C)  [nn.Conv2d 1x1 weight squeezed],
                      bias (na*no,)).
    anchors: (nl, na, 2) float32 raw anchors (module buffer).
    strides: per-level stride.
    Returns (cat(z, 1), [x[i] as (bs, na, ny, nx, no)]); with export=True the
    raw x[i] list is empty (and never written by the kernel).
    """
    nl = len(xs)
    na = int(anchors.shape[1])
    no = nc + 5
    n = na * no
    n_pad = ((n + 7) // 8) * 8           # sublane-pad output channels (27->32)

    z, raws = [], []
    for i in range(nl):
        x = xs[i]
        bs, ny, nx, c = map(int, x.shape)
        m = bs * ny * nx
        w_oc, bias = params[i]           # (na*no, c), (na*no,)
        s_i = float(strides[i])
        anc = np.asarray(anchors[i], np.float32)          # (na, 2)

        # ---- static per-row decode coefficients (hoisted out of kernel) ----
        # rows are anchor-major / field-minor = Conv2d out-channel order.
        coef_np = np.zeros((n_pad, 5), np.float32)
        for a in range(na):
            r = a * no
            coef_np[r + 0, 1] = 2.0 * s_i                 # x: (2s + gx)*stride
            coef_np[r + 1, 1] = 2.0 * s_i                 # y
            coef_np[r + 4:r + no, 1] = 1.0                # conf / cls: s
            coef_np[r + 2, 2] = 4.0 * anc[a, 0] * s_i     # w: (2s)^2*aw*stride
            coef_np[r + 3, 2] = 4.0 * anc[a, 1] * s_i     # h
            coef_np[r + 0, 3] = s_i                       # gx * stride
            coef_np[r + 1, 4] = s_i                       # gy * stride
        coef = jnp.asarray(coef_np).at[:n, 0].set(
            jnp.asarray(bias, jnp.float32).reshape(n))

        # ---- conv weight, sublane-padded rows, MXU-native bf16 -------------
        wt = jnp.zeros((n_pad, c), matmul_dtype).at[:n, :].set(
            jnp.asarray(w_oc, matmul_dtype))

        # TODO(synk): in a fused pipeline the producer layer would already
        # emit bf16 activations; here the cast is one cheap elementwise op.
        x_flat = x.reshape(m, c).astype(matmul_dtype)

        # ---- row tiling -----------------------------------------------------
        tm = _plan_rows(m)
        grid = (pl.cdiv(m, tm),)
        kern = functools.partial(
            _detect_kernel_export if export else _detect_kernel, ny=ny, nx=nx)
        y_shape = jax.ShapeDtypeStruct((n_pad, m), jnp.float32)
        y_spec = pl.BlockSpec((n_pad, tm), lambda g: (0, g))
        out_shape = y_shape if export else (y_shape, y_shape)
        out_specs = y_spec if export else (y_spec, y_spec)

        outs = pl.pallas_call(
            kern,
            out_shape=out_shape,
            grid=grid,
            in_specs=[
                pl.BlockSpec((tm, c), lambda g: (g, 0)),      # activations
                pl.BlockSpec((n_pad, c), lambda g: (0, 0)),   # conv weight
                pl.BlockSpec((n_pad, 5), lambda g: (0, 0)),   # bias + decode coefs
            ],
            out_specs=out_specs,
            compiler_params=pltpu.CompilerParams(
                dimension_semantics=("parallel",),
                vmem_limit_bytes=32 * 1024 * 1024),
        )(x_flat, wt, coef)

        y_t = outs if export else outs[1]
        # TODO(synk): the permute back to (bs, na, ny, nx, no) stays in XLA
        # glue - no = nc+5 (<128) in the minor dim is incompatible with
        # lane-dense kernel stores.
        y5 = y_t[:n, :].reshape(na, no, bs, ny, nx).transpose(2, 0, 3, 4, 1)
        z.append(y5.reshape(bs, na * ny * nx, no))
        if not export:
            raw_t = outs[0]
            raws.append(raw_t[:n, :].reshape(na, no, bs, ny, nx)
                        .transpose(2, 0, 3, 4, 1))

    # TODO(synk): for better v7x dual-TC utilisation on small levels, the
    # per-level pallas_calls could be fused into one PrefetchScalarGridSpec
    # call over a stacked weight tensor; kept per-level here for clarity.
    return jnp.concatenate(z, axis=1), raws


def _detect_forward_ref(xs, params, anchors, strides, nc):
    """Pure-JAX reference (mirrors the PyTorch forward) for validation."""
    na = int(anchors.shape[1])
    no = nc + 5
    z, raws = [], []
    for i in range(len(xs)):
        x = xs[i]
        bs, ny, nx, c = x.shape
        w_oc, bias = params[i]
        raw = x.reshape(bs * ny * nx, c) @ w_oc.T + bias
        raw5 = raw.reshape(bs, ny, nx, na, no).transpose(0, 3, 1, 2, 4)
        raws.append(raw5)
        s = jax.nn.sigmoid(raw5)
        yv, xv = jnp.meshgrid(jnp.arange(ny, dtype=jnp.float32),
                              jnp.arange(nx, dtype=jnp.float32), indexing="ij")
        grid = (jnp.stack([xv, yv], axis=-1) - 0.5)[None, None]
        anchor_grid = (anchors[i] * strides[i]).reshape(1, na, 1, 1, 2)
        xy = (s[..., 0:2] * 2.0 + grid) * strides[i]
        wh = (s[..., 2:4] * 2.0) ** 2 * anchor_grid
        conf = s[..., 4:]
        y = jnp.concatenate([xy, wh, conf], axis=-1)
        z.append(y.reshape(bs, na * ny * nx, no))
    return jnp.concatenate(z, axis=1), raws


if __name__ == "__main__":
    key = jax.random.PRNGKey(0)

    # Small Detect config: nc=4 classes, 2 levels, 3 anchors per level.
    nc = 4
    anchors_py = ((10, 13, 16, 30, 33, 23), (30, 61, 62, 45, 59, 119))
    anchors = jnp.asarray(anchors_py, jnp.float32).reshape(len(anchors_py), -1, 2)
    strides = [8.0, 16.0]            # Detect.stride (set externally in the build)
    ch = (8, 16)                     # input channels per level
    spatial = [(16, 16), (8, 8)]     # (ny, nx) per level
    bs = 2
    na = int(anchors.shape[1])
    no = nc + 5

    keys = jax.random.split(key, 3 * len(ch))
    xs, params = [], []
    for i, (c, (ny, nx)) in enumerate(zip(ch, spatial)):
        kx, kw, kb = keys[3 * i], keys[3 * i + 1], keys[3 * i + 2]
        xs.append(jax.random.normal(kx, (bs, ny, nx, c), dtype=jnp.float32))
        # nn.Conv2d(c, no*na, 1): weight (na*no, c, 1, 1) squeezed -> (na*no, c)
        w = 0.1 * jax.random.normal(kw, (na * no, c), dtype=jnp.float32)
        b = 0.1 * jax.random.normal(kb, (na * no,), dtype=jnp.float32)
        params.append((w, b))

    z_cat, raws = detect_forward(xs, params, anchors, strides, nc)
    z_cat = jax.block_until_ready(z_cat)
    raws = [jax.block_until_ready(r) for r in raws]

    # export path (no raw output written at all)
    z_exp, _ = detect_forward(xs, params, anchors, strides, nc, export=True)
    z_exp = jax.block_until_ready(z_exp)

    # Validate against a pure-JAX reference of the same forward.
    z_ref, raws_ref = _detect_forward_ref(xs, params, anchors, strides, nc)
    assert z_cat.shape == (bs, na * sum(ny * nx for ny, nx in spatial), no)
    # Tolerances reflect the bf16 matmul operands (f32 accumulate, ~0.4%
    # relative) only - the sigmoid is exact (tanh form, no approx recip).
    for r, rr in zip(raws, raws_ref):
        np.testing.assert_allclose(np.asarray(r), np.asarray(rr),
                                   rtol=2e-2, atol=2e-2)
    np.testing.assert_allclose(np.asarray(z_cat), np.asarray(z_ref),
                               rtol=2e-2, atol=1e-1)
    np.testing.assert_allclose(np.asarray(z_exp), np.asarray(z_ref),
                               rtol=2e-2, atol=1e-1)

    print("KERNEL_OK")
</pallas_src>

<mosaic_0001>
module attributes {stable_mosaic.version = 11 : i64} {
  func.func @_detect_kernel(%arg0: i32, %arg1: memref<256x8xbf16, #tpu.memory_space<vmem>>, %arg2: memref<32x8xbf16, #tpu.memory_space<vmem>>, %arg3: memref<32x5xf32, #tpu.memory_space<vmem>>, %arg4: memref<32x256xf32, #tpu.memory_space<vmem>>, %arg5: memref<32x256xf32, #tpu.memory_space<vmem>>) attributes {dimension_semantics = [#tpu.dimension_semantics<parallel>], iteration_bounds = array<i64: 2>, scalar_prefetch = 0 : i64, scratch_operands = 0 : i64, tpu.core_type = #tpu.core_type<tc>, window_params = [{transform_indices = @transform_0, window_bounds = array<i64: 256, 8>}, {pipeline_mode = #tpu.pipeline_mode<synchronous>, transform_indices = @transform_1, window_bounds = array<i64: 32, 8>}, {pipeline_mode = #tpu.pipeline_mode<synchronous>, transform_indices = @transform_2, window_bounds = array<i64: 32, 5>}, {transform_indices = @transform_3, window_bounds = array<i64: 32, 256>}, {transform_indices = @transform_4, window_bounds = array<i64: 32, 256>}]} {
    %c0 = arith.constant 0 : index
    %c0_0 = arith.constant 0 : index
    %0 = vector.load %arg2[%c0, %c0_0] : memref<32x8xbf16, #tpu.memory_space<vmem>>, vector<32x8xbf16>
    %c0_1 = arith.constant 0 : index
    %c0_2 = arith.constant 0 : index
    %1 = vector.load %arg1[%c0_1, %c0_2] : memref<256x8xbf16, #tpu.memory_space<vmem>>, vector<256x8xbf16>
    %cst = arith.constant dense<0.000000e+00> : vector<32x256xf32>
    %2 = tpu.matmul %0, %1, %cst {dimension_numbers = #tpu.dot_dimension_numbers<[1], [1], [0], [0], [0, 0, 1, 0], [], []>} : vector<32x8xbf16>, vector<256x8xbf16>, vector<32x256xf32> -> vector<32x256xf32>
    %c0_3 = arith.constant 0 : index
    %c0_4 = arith.constant 0 : index
    %3 = vector.load %arg3[%c0_3, %c0_4] : memref<32x5xf32, #tpu.memory_space<vmem>>, vector<32x1xf32>
    %4 = vector.broadcast %3 : vector<32x1xf32> to vector<32x256xf32>
    %5 = arith.addf %2, %4 : vector<32x256xf32>
    %cst_5 = arith.constant 5.000000e-01 : f32
    %6 = vector.broadcast %cst_5 : f32 to vector<32x256xf32>
    %7 = arith.mulf %6, %5 : vector<32x256xf32>
    %8 = math.tanh %7 : vector<32x256xf32>
    %cst_6 = arith.constant 1.000000e+00 : f32
    %9 = vector.broadcast %cst_6 : f32 to vector<32x256xf32>
    %10 = arith.addf %8, %9 : vector<32x256xf32>
    %cst_7 = arith.constant 5.000000e-01 : f32
    %11 = vector.broadcast %cst_7 : f32 to vector<32x256xf32>
    %12 = arith.mulf %11, %10 : vector<32x256xf32>
    %c256_i32 = arith.constant 256 : i32
    %13 = arith.muli %arg0, %c256_i32 : i32
    %14 = arith.sitofp %13 : i32 to f32
    %15 = tpu.iota {dimensions = array<i32: 1>} : vector<1x256xi32>
    %16 = arith.sitofp %15 : vector<1x256xi32> to vector<1x256xf32>
    %17 = vector.broadcast %14 : f32 to vector<1x256xf32>
    %18 = arith.addf %16, %17 : vector<1x256xf32>
    %cst_8 = arith.constant 5.000000e-01 : f32
    %19 = vector.broadcast %cst_8 : f32 to vector<1x256xf32>
    %20 = arith.addf %18, %19 : vector<1x256xf32>
    %cst_9 = arith.constant 2.560000e+02 : f32
    %21 = vector.broadcast %cst_9 : f32 to vector<1x256xf32>
    %22 = arith.divf %20, %21 : vector<1x256xf32>
    %23 = math.floor %22 : vector<1x256xf32>
    %cst_10 = arith.constant 2.560000e+02 : f32
    %24 = vector.broadcast %cst_10 : f32 to vector<1x256xf32>
    %25 = arith.mulf %23, %24 : vector<1x256xf32>
    %26 = arith.subf %18, %25 : vector<1x256xf32>
    %cst_11 = arith.constant 5.000000e-01 : f32
    %27 = vector.broadcast %cst_11 : f32 to vector<1x256xf32>
    %28 = arith.addf %26, %27 : vector<1x256xf32>
    %cst_12 = arith.constant 1.600000e+01 : f32
    %29 = vector.broadcast %cst_12 : f32 to vector<1x256xf32>
    %30 = arith.divf %28, %29 : vector<1x256xf32>
    %31 = math.floor %30 : vector<1x256xf32>
    %cst_13 = arith.constant 1.600000e+01 : f32
    %32 = vector.broadcast %cst_13 : f32 to vector<1x256xf32>
    %33 = arith.mulf %31, %32 : vector<1x256xf32>
    %34 = arith.subf %26, %33 : vector<1x256xf32>
    %cst_14 = arith.constant 5.000000e-01 : f32
    %35 = vector.broadcast %cst_14 : f32 to vector<1x256xf32>
    %36 = arith.subf %34, %35 : vector<1x256xf32>
    %cst_15 = arith.constant 5.000000e-01 : f32
    %37 = vector.broadcast %cst_15 : f32 to vector<1x256xf32>
    %38 = arith.subf %31, %37 : vector<1x256xf32>
    %c0_16 = arith.constant 0 : index
    %c1 = arith.constant 1 : index
    %39 = vector.load %arg3[%c0_16, %c1] : memref<32x5xf32, #tpu.memory_space<vmem>>, vector<32x1xf32>
    %c0_17 = arith.constant 0 : index
    %c2 = arith.constant 2 : index
    %40 = vector.load %arg3[%c0_17, %c2] : memref<32x5xf32, #tpu.memory_space<vmem>>, vector<32x1xf32>
    %41 = vector.broadcast %40 : vector<32x1xf32> to vector<32x256xf32>
    %42 = arith.mulf %12, %41 : vector<32x256xf32>
    %43 = vector.broadcast %39 : vector<32x1xf32> to vector<32x256xf32>
    %44 = arith.addf %43, %42 : vector<32x256xf32>
    %45 = arith.mulf %12, %44 : vector<32x256xf32>
    %c0_18 = arith.constant 0 : index
    %c3 = arith.constant 3 : index
    %46 = vector.load %arg3[%c0_18, %c3] : memref<32x5xf32, #tpu.memory_space<vmem>>, vector<32x1xf32>
    %47 = vector.broadcast %36 : vector<1x256xf32> to vector<32x256xf32>
    %48 = vector.broadcast %46 : vector<32x1xf32> to vector<32x256xf32>
    %49 = arith.mulf %47, %48 : vector<32x256xf32>
    %50 = arith.addf %45, %49 : vector<32x256xf32>
    %c0_19 = arith.constant 0 : index
    %c4 = arith.constant 4 : index
    %51 = vector.load %arg3[%c0_19, %c4] : memref<32x5xf32, #tpu.memory_space<vmem>>, vector<32x1xf32>
    %52 = vector.broadcast %38 : vector<1x256xf32> to vector<32x256xf32>
    %53 = vector.broadcast %51 : vector<32x1xf32> to vector<32x256xf32>
    %54 = arith.mulf %52, %53 : vector<32x256xf32>
    %55 = arith.addf %50, %54 : vector<32x256xf32>
    %c0_20 = arith.constant 0 : index
    %c0_21 = arith.constant 0 : index
    %56 = vector.load %arg4[%c0_20, %c0_21] : memref<32x256xf32, #tpu.memory_space<vmem>>, vector<32x256xf32>
    tpu.vector_store %arg4[%c0_20, %c0_21], %5 {strides = array<i32>} : memref<32x256xf32, #tpu.memory_space<vmem>>, vector<32x256xf32>,
    %c0_22 = arith.constant 0 : index
    %c0_23 = arith.constant 0 : index
    %57 = vector.load %arg5[%c0_22, %c0_23] : memref<32x256xf32, #tpu.memory_space<vmem>>, vector<32x256xf32>
    tpu.vector_store %arg5[%c0_22, %c0_23], %55 {strides = array<i32>} : memref<32x256xf32, #tpu.memory_space<vmem>>, vector<32x256xf32>,
    return
  }
  func.func @transform_0(%arg0: i32) -> (i32, i32) {
    %c0_i32 = arith.constant 0 : i32
    %c0_i32_0 = arith.constant 0 : i32
    return %arg0, %c0_i32 : i32, i32
  }
  func.func @transform_1(%arg0: i32) -> (i32, i32) {
    %c0_i32 = arith.constant 0 : i32
    %c0_i32_0 = arith.constant 0 : i32
    %c0_i32_1 = arith.constant 0 : i32
    return %c0_i32, %c0_i32_0 : i32, i32
  }
  func.func @transform_2(%arg0: i32) -> (i32, i32) {
    %c0_i32 = arith.constant 0 : i32
    %c0_i32_0 = arith.constant 0 : i32
    %c0_i32_1 = arith.constant 0 : i32
    return %c0_i32, %c0_i32_0 : i32, i32
  }
  func.func @transform_3(%arg0: i32) -> (i32, i32) {
    %c0_i32 = arith.constant 0 : i32
    %c0_i32_0 = arith.constant 0 : i32
    return %c0_i32, %arg0 : i32, i32
  }
  func.func @transform_4(%arg0: i32) -> (i32, i32) {
    %c0_i32 = arith.constant 0 : i32
    %c0_i32_0 = arith.constant 0 : i32
    return %c0_i32, %arg0 : i32, i32
  }
}

</mosaic_0001>

<llo_original>
// kernel: tpu_custom_call.1
$region0: #{tpu_custom_call.1}
  #allocation0 [shape = 'u32[]', space=smem, size = 0x4, offset = 0x4, fixed_abs, tag = 'smem constant byte address 0x4 - core index']
  #allocation1 [shape = 'u32[72,128]{1,0:T(1,128)}', space=vmem, size = 0x9000, scoped, tag = 'internal scratch']
  %s0 = inlined_call_operand.vmem [shape: bf16[512,8], index: 0, kind: input, shape index: {}]
  %s1 = inlined_call_operand.vmem [shape: bf16[32,8], index: 1, kind: input, shape index: {}]
  %s2 = inlined_call_operand.vmem [shape: f32[32,5], index: 2, kind: input, shape index: {}]
  %s3 = inlined_call_operand.hbm [shape: f32[32,512], index: 3, kind: output, shape index: {0}]
  %s4 = inlined_call_operand.hbm [shape: f32[32,512], index: 4, kind: output, shape index: {1}]
  %5 = xla_tuple %s3, %s4
  %s6 = sld [smem:[#allocation0]]
  $region53: #{tpu_custom_call.1} parent=0
    _
  %s8 = ssub.s32 1, %s6
  %s9 = scalar_select 0, %s8, %s6
  $region1: #{tpu_custom_call.1} parent=0
    #allocation2 [shape = 'u8[65536]{0}', space=vmem, size = 0x10000, scoped, tag = 'output window, operand 0']
    #allocation3 [shape = 's32[2]{0}', space=sflag, size = 0x8, scoped, tag = 'scoped memory for tpu_custom_call.1']
    #allocation4 [shape = 'u8[65536]{0}', space=vmem, size = 0x10000, scoped, tag = 'output window, operand 1']
    #allocation5 [shape = 's32[2]{0}', space=sflag, size = 0x8, scoped, tag = 'scoped memory for tpu_custom_call.1']
    %10 = vsyncpa [#allocation3], 0
    %s11 = scalar_lea.sflag [#allocation3], 1
    %12 = vsyncpa %s11, 0
    %13 = vsyncpa [#allocation5], 0
    %s14 = scalar_lea.sflag [#allocation5], 1
    %15 = vsyncpa %s14, 0
    loop: start=0, step=1, limit=4
    $region2: #{tpu_custom_call.1} parent=1 // loop_pre_header
      _
    $region3: #{tpu_custom_call.1} parent=1 // loop_header
      %s17 = sphi 0, %s21
      %p18 = scmp.ge.s32.totalorder %s17, 4
      %s27 = sphi 0, %s29
      %s30 = sphi 0, %s27
      %s31 = sphi 0, %s30
      %s47 = sphi 0, %s31
      %s51 = sphi 0, %s51
      %s53 = sphi 0, %s51
      %s54 = sphi 0, %s53
      %s68 = sphi 0, %s54
      %s72 = sphi 0, %s72
      %s74 = sphi 0, %s72
      %s75 = sphi 0, %s74
      %s89 = sphi 0, %s75
      %s95 = sphi 0, %s97
      %s98 = sphi 0, %s95
      %s99 = sphi 0, %s98
      %s115 = sphi 0, %s99
      %s121 = sphi 0, %s123
      %s124 = sphi 0, %s121
      %s125 = sphi 0, %s124
      %s141 = sphi 0, %s125
    $region4: #{tpu_custom_call.1} parent=1 // loop_header_branch
      %20 = sbr.rel (%p18) target = $region8
    $region5: #{tpu_custom_call.1} parent=1 // loop_body
      %s22 = ssub.s32 %s17, 1
      %s23 = ssub.s32 %s17, 2
      %s24 = sadd.s32 %s17, 1
      %s25 = ssub.s32 %s17, %s24
      %p26 = scmp.eq.s32.totalorder %s25, 0
      %s28 = sadd.s32 %s27, 1
      %s29 = scalar_select %p26, %s27, %s28
      %p32 = pneg %p26
      %p33 = scmp.eq.s32.totalorder %s17, 1
      %p34 = por %p32, %p33
      %p35 = scmp.ne.s32.totalorder %s27, %s30
      %p36 = scmp.eq.s32.totalorder %s17, 0
      %p37 = por %p35, %p36
      %p38 = scmp.ne.s32.totalorder %s27, %s30
      %p39 = scmp.eq.s32.totalorder %s22, 1
      %p40 = por %p38, %p39
      %p41 = scmp.ne.s32.totalorder %s30, %s31
      %p42 = scmp.eq.s32.totalorder %s22, 0
      %p43 = por %p41, %p42
      %p44 = scmp.ne.s32.totalorder %s30, %s31
      %p45 = scmp.eq.s32.totalorder %s23, 1
      %p46 = por %p44, %p45
      %p48 = scmp.ne.s32.totalorder %s31, %s47
      %p49 = scmp.eq.s32.totalorder %s23, 0
      %p50 = por %p48, %p49
      %s52 = sadd.s32 %s51, 1
      %p55 = scmp.eq.s32.totalorder %s17, 1
      %p56 = scmp.ne.s32.totalorder %s51, %s53
      %p57 = scmp.eq.s32.totalorder %s17, 0
      %p58 = por %p56, %p57
      %p59 = scmp.ne.s32.totalorder %s51, %s53
      %p60 = scmp.eq.s32.totalorder %s22, 1
      %p61 = por %p59, %p60
      %p62 = scmp.ne.s32.totalorder %s53, %s54
      %p63 = scmp.eq.s32.totalorder %s22, 0
      %p64 = por %p62, %p63
      %p65 = scmp.ne.s32.totalorder %s53, %s54
      %p66 = scmp.eq.s32.totalorder %s23, 1
      %p67 = por %p65, %p66
      %p69 = scmp.ne.s32.totalorder %s54, %s68
      %p70 = scmp.eq.s32.totalorder %s23, 0
      %p71 = por %p69, %p70
      %s73 = sadd.s32 %s72, 1
      %p76 = scmp.eq.s32.totalorder %s17, 1
      %p77 = scmp.ne.s32.totalorder %s72, %s74
      %p78 = scmp.eq.s32.totalorder %s17, 0
      %p79 = por %p77, %p78
      %p80 = scmp.ne.s32.totalorder %s72, %s74
      %p81 = scmp.eq.s32.totalorder %s22, 1
      %p82 = por %p80, %p81
      %p83 = scmp.ne.s32.totalorder %s74, %s75
      %p84 = scmp.eq.s32.totalorder %s22, 0
      %p85 = por %p83, %p84
      %p86 = scmp.ne.s32.totalorder %s74, %s75
      %p87 = scmp.eq.s32.totalorder %s23, 1
      %p88 = por %p86, %p87
      %p90 = scmp.ne.s32.totalorder %s75, %s89
      %p91 = scmp.eq.s32.totalorder %s23, 0
      %p92 = por %p90, %p91
      %s93 = ssub.s32 %s17, %s24
      %p94 = scmp.eq.s32.totalorder %s93, 0
      %s96 = sadd.s32 %s95, 1
      %s97 = scalar_select %p94, %s95, %s96
      %p100 = pneg %p94
      %p101 = scmp.eq.s32.totalorder %s17, 1
      %p102 = por %p100, %p101
      %p103 = scmp.ne.s32.totalorder %s95, %s98
      %p104 = scmp.eq.s32.totalorder %s17, 0
      %p105 = por %p103, %p104
      %p106 = scmp.ne.s32.totalorder %s95, %s98
      %p107 = scmp.eq.s32.totalorder %s22, 1
      %p108 = por %p106, %p107
      %p109 = scmp.ne.s32.totalorder %s98, %s99
      %p110 = scmp.eq.s32.totalorder %s22, 0
      %p111 = por %p109, %p110
      %p112 = scmp.ne.s32.totalorder %s98, %s99
      %p113 = scmp.eq.s32.totalorder %s23, 1
      %p114 = por %p112, %p113
      %p116 = scmp.ne.s32.totalorder %s99, %s115
      %p117 = scmp.eq.s32.totalorder %s23, 0
      %p118 = por %p116, %p117
      %s119 = ssub.s32 %s17, %s24
      %p120 = scmp.eq.s32.totalorder %s119, 0
      %s122 = sadd.s32 %s121, 1
      %s123 = scalar_select %p120, %s121, %s122
      %p126 = pneg %p120
      %p127 = scmp.eq.s32.totalorder %s17, 1
      %p128 = por %p126, %p127
      %p129 = scmp.ne.s32.totalorder %s121, %s124
      %p130 = scmp.eq.s32.totalorder %s17, 0
      %p131 = por %p129, %p130
      %p132 = scmp.ne.s32.totalorder %s121, %s124
      %p133 = scmp.eq.s32.totalorder %s22, 1
      %p134 = por %p132, %p133
      %p135 = scmp.ne.s32.totalorder %s124, %s125
      %p136 = scmp.eq.s32.totalorder %s22, 0
      %p137 = por %p135, %p136
      %p138 = scmp.ne.s32.totalorder %s124, %s125
      %p139 = scmp.eq.s32.totalorder %s23, 1
      %p140 = por %p138, %p139
      %p142 = scmp.ne.s32.totalorder %s125, %s141
      %p143 = scmp.eq.s32.totalorder %s23, 0
      %p144 = por %p142, %p143
      %p145 = scmp.le.s32.totalorder 1, %s17
      %p146 = scmp.lt.s32.totalorder %s17, 3
      %p147 = pnand %p145, %p146
      %p148 = pneg %p147
      // Predicated region
      $region9: #{tpu_custom_call.1} parent=5 // pred_check
        _
      $region10: #{tpu_custom_call.1} parent=5 // pred_check_branch
        %150 = sbr.rel (%p147) target = $region12
      $region11: #{tpu_custom_call.1} parent=5 // pred_region
        %s151 = ssub.s32 %s17, 1
        // Predicated region
        $region13: #{tpu_custom_call.1} parent=11 // pred_check
          %p152 = pneg %p64
        $region14: #{tpu_custom_call.1} parent=11 // pred_check_branch
          %154 = sbr.rel (%p152) target = $region16
        $region15: #{tpu_custom_call.1} parent=11 // pred_region
          _
        $region16: #{tpu_custom_call.1} parent=11 // pred_fallthru
          _
        // Predicated region
        $region17: #{tpu_custom_call.1} parent=11 // pred_check
          %p155 = pneg %p85
        $region18: #{tpu_custom_call.1} parent=11 // pred_check_branch
          %157 = sbr.rel (%p155) target = $region20
        $region19: #{tpu_custom_call.1} parent=11 // pred_region
          _
        $region20: #{tpu_custom_call.1} parent=11 // pred_fallthru
          _
      $region12: #{tpu_custom_call.1} parent=5 // pred_fallthru
        _
      %p158 = scmp.lt.s32.totalorder %s17, 2
      // Predicated region
      $region21: #{tpu_custom_call.1} parent=5 // pred_check
        %p159 = pneg %p158
      $region22: #{tpu_custom_call.1} parent=5 // pred_check_branch
        %161 = sbr.rel (%p159) target = $region24
      $region23: #{tpu_custom_call.1} parent=5 // pred_region
        // Predicated region
        $region25: #{tpu_custom_call.1} parent=23 // pred_check
          %p162 = pneg %p37
        $region26: #{tpu_custom_call.1} parent=23 // pred_check_branch
          %164 = sbr.rel (%p162) target = $region28
        $region27: #{tpu_custom_call.1} parent=23 // pred_region
          %s165 = smul.u32 32, %s17
          %p166 = scmp.lt.s32.totalorder %s165, 63
          %s167 = scalar_select %p166, %s165, 63
          %s168 = smul.addr %s167, 4
          %s169 = scalar_lea.vmem %s0, %s168
          %s170 = smul.u32 32, %s17
        $region28: #{tpu_custom_call.1} parent=23 // pred_fallthru
          _
      $region24: #{tpu_custom_call.1} parent=5 // pred_fallthru
        _
      %p171 = scmp.le.s32.totalorder 1, %s17
      %p172 = scmp.lt.s32.totalorder %s17, 3
      %p173 = pnand %p171, %p172
      %p174 = pneg %p173
      // Predicated region
      $region29: #{tpu_custom_call.1} parent=5 // pred_check
        _
      $region30: #{tpu_custom_call.1} parent=5 // pred_check_branch
        %176 = sbr.rel (%p173) target = $region32
      $region31: #{tpu_custom_call.1} parent=5 // pred_region
        %s177 = ssub.s32 %s17, 1
        %s178 = smul.u32 32, %s22
        %p179 = scmp.lt.s32.totalorder %s178, 63
        %s180 = scalar_select %p179, %s178, 63
        %s181 = smul.addr %s180, 4
        %s182 = scalar_lea.vmem %s0, %s181
        %p183 = pneg %p43
        %p184 = pneg %p40
        %p185 = pneg %p64
        %p186 = pneg %p61
        %p187 = pneg %p85
        %p188 = pneg %p82
        %p189 = pneg %p111
        %p190 = pneg %p108
        %s191 = sand.u32 %s98, 1
        %s192 = scalar_lea.sflag [#allocation3], %s191
        %s193 = sand.u32 %s98, 1
        %s194 = smul.addr %s193, 64
        %s195 = scalar_lea.vmem [#allocation2], %s194
        %p196 = pneg %p137
        %p197 = pneg %p134
        %s198 = sand.u32 %s124, 1
        %s199 = scalar_lea.sflag [#allocation5], %s198
        %s200 = sand.u32 %s124, 1
        %s201 = smul.addr %s200, 64
        %s202 = scalar_lea.vmem [#allocation4], %s201
        %s203 = smul.u32 32, %s22
        %p204 = scmp.lt.s32.totalorder %s203, 63
        %s205 = scalar_select %p204, %s203, 63
        %s206 = smul.addr %s205, 4
        %s207 = scalar_lea.vmem %s0, %s206
        %s208 = smul.u32 32, %s22
        %s209 = smul.u32 2, %s22
        %s210 = smul.u32 2, %s22
        %v211 = vld [vmem:[%s1] sm:$0xf]
        %v212 = vld [vmem:[%s1 + $0x4] sm:$0xf]
        %v213 = vld [vmem:[%s1 + $0x8] sm:$0xf]
        %v214 = vld [vmem:[%s1 + $0xc] sm:$0xf]
        %v215 = vld [vmem:[%s207] sm:$0xf]
        %v216 = vld [vmem:[%s207 + $0x4] sm:$0xf]
        %v217 = vld [vmem:[%s207 + $0x8] sm:$0xf]
        %v218 = vld [vmem:[%s207 + $0xc] sm:$0xf]
        %v219 = vld [vmem:[%s207 + $0x10] sm:$0xf]
        %v220 = vld [vmem:[%s207 + $0x14] sm:$0xf]
        %v221 = vld [vmem:[%s207 + $0x18] sm:$0xf]
        %v222 = vld [vmem:[%s207 + $0x1c] sm:$0xf]
        %v223 = vld [vmem:[%s207 + $0x20] sm:$0xf]
        %v224 = vld [vmem:[%s207 + $0x24] sm:$0xf]
        %v225 = vld [vmem:[%s207 + $0x28] sm:$0xf]
        %v226 = vld [vmem:[%s207 + $0x2c] sm:$0xf]
        %v227 = vld [vmem:[%s207 + $0x30] sm:$0xf]
        %v228 = vld [vmem:[%s207 + $0x34] sm:$0xf]
        %v229 = vld [vmem:[%s207 + $0x38] sm:$0xf]
        %v230 = vld [vmem:[%s207 + $0x3c] sm:$0xf]
        %v231 = vld [vmem:[%s207 + $0x40] sm:$0xf]
        %v232 = vld [vmem:[%s207 + $0x44] sm:$0xf]
        %v233 = vld [vmem:[%s207 + $0x48] sm:$0xf]
        %v234 = vld [vmem:[%s207 + $0x4c] sm:$0xf]
        %v235 = vld [vmem:[%s207 + $0x50] sm:$0xf]
        %v236 = vld [vmem:[%s207 + $0x54] sm:$0xf]
        %v237 = vld [vmem:[%s207 + $0x58] sm:$0xf]
        %v238 = vld [vmem:[%s207 + $0x5c] sm:$0xf]
        %v239 = vld [vmem:[%s207 + $0x60] sm:$0xf]
        %v240 = vld [vmem:[%s207 + $0x64] sm:$0xf]
        %v241 = vld [vmem:[%s207 + $0x68] sm:$0xf]
        %v242 = vld [vmem:[%s207 + $0x6c] sm:$0xf]
        %v243 = vld [vmem:[%s207 + $0x70] sm:$0xf]
        %v244 = vld [vmem:[%s207 + $0x74] sm:$0xf]
        %v245 = vld [vmem:[%s207 + $0x78] sm:$0xf]
        %v246 = vld [vmem:[%s207 + $0x7c] sm:$0xf]
        %v247 = vld [vmem:[%s2] sm:$0xff]
        %v248 = vld [vmem:[%s2 + $0x8] sm:$0xff]
        %v249 = vld [vmem:[%s2 + $0x10] sm:$0xff]
        %v250 = vld [vmem:[%s2 + $0x18] sm:$0xff]
        %252 = vset.pattern.permute.xlu0 0
        %253 = vperm.xlu0 %252, %v247
        %v254 = vpop.permute.xlu0 %253
        %257 = vset.pattern.permute.xlu0 0
        %258 = vperm.xlu0 %257, %v248
        %v259 = vpop.permute.xlu0 %258
        %262 = vset.pattern.permute.xlu0 0
        %263 = vperm.xlu0 %262, %v249
        %v264 = vpop.permute.xlu0 %263
        %267 = vset.pattern.permute.xlu0 0
        %268 = vperm.xlu0 %267, %v250
        %v269 = vpop.permute.xlu0 %268
        %v275 = vunpack.c.l.b16 %v211
        %v276 = vunpack.c.l.b16 %v212
        %v277 = vunpack.c.l.b16 %v213
        %v278 = vunpack.c.l.b16 %v214
        %v279 = vpack.c.b16 %v276, %v275
        %v280 = vpack.c.b16 %v278, %v277
        %v313 = vunpack.c.l.b16 %v215
        %v314 = vunpack.c.l.b16 %v216
        %v315 = vunpack.c.l.b16 %v217
        %v316 = vunpack.c.l.b16 %v218
        %v317 = vunpack.c.l.b16 %v219
        %v318 = vunpack.c.l.b16 %v220
        %v319 = vunpack.c.l.b16 %v221
        %v320 = vunpack.c.l.b16 %v222
        %v321 = vunpack.c.l.b16 %v223
        %v322 = vunpack.c.l.b16 %v224
        %v323 = vunpack.c.l.b16 %v225
        %v324 = vunpack.c.l.b16 %v226
        %v325 = vunpack.c.l.b16 %v227
        %v326 = vunpack.c.l.b16 %v228
        %v327 = vunpack.c.l.b16 %v229
        %v328 = vunpack.c.l.b16 %v230
        %v329 = vunpack.c.l.b16 %v231
        %v330 = vunpack.c.l.b16 %v232
        %v331 = vunpack.c.l.b16 %v233
        %v332 = vunpack.c.l.b16 %v234
        %v333 = vunpack.c.l.b16 %v235
        %v334 = vunpack.c.l.b16 %v236
        %v335 = vunpack.c.l.b16 %v237
        %v336 = vunpack.c.l.b16 %v238
        %v337 = vunpack.c.l.b16 %v239
        %v338 = vunpack.c.l.b16 %v240
        %v339 = vunpack.c.l.b16 %v241
        %v340 = vunpack.c.l.b16 %v242
        %v341 = vunpack.c.l.b16 %v243
        %v342 = vunpack.c.l.b16 %v244
        %v343 = vunpack.c.l.b16 %v245
        %v344 = vunpack.c.l.b16 %v246
        %v345 = vpack.c.b16 %v314, %v313
        %v346 = vpack.c.b16 %v316, %v315
        %v347 = vpack.c.b16 %v318, %v317
        %v348 = vpack.c.b16 %v320, %v319
        %v349 = vpack.c.b16 %v322, %v321
        %v350 = vpack.c.b16 %v324, %v323
        %v351 = vpack.c.b16 %v326, %v325
        %v352 = vpack.c.b16 %v328, %v327
        %v353 = vpack.c.b16 %v330, %v329
        %v354 = vpack.c.b16 %v332, %v331
        %v355 = vpack.c.b16 %v334, %v333
        %v356 = vpack.c.b16 %v336, %v335
        %v357 = vpack.c.b16 %v338, %v337
        %v358 = vpack.c.b16 %v340, %v339
        %v359 = vpack.c.b16 %v342, %v341
        %v360 = vpack.c.b16 %v344, %v343
        %vm361 = vcmask 64512
        %v363 = vsel %vm361, %v279, 0
        %v366 = vsel %vm361, %v280, 0
        %v369 = vsel %vm361, %v345, 0
        %v372 = vsel %vm361, %v346, 0
        %v375 = vsel %vm361, %v347, 0
        %v378 = vsel %vm361, %v348, 0
        %v381 = vsel %vm361, %v349, 0
        %v384 = vsel %vm361, %v350, 0
        %v387 = vsel %vm361, %v351, 0
        %v390 = vsel %vm361, %v352, 0
        %v393 = vsel %vm361, %v353, 0
        %v396 = vsel %vm361, %v354, 0
        %v399 = vsel %vm361, %v355, 0
        %v402 = vsel %vm361, %v356, 0
        %v405 = vsel %vm361, %v357, 0
        %v408 = vsel %vm361, %v358, 0
        %v411 = vsel %vm361, %v359, 0
        %v414 = vsel %vm361, %v360, 0
        %416 = vmatpush.bf16.xpose.msra.mxu0 %v390
        %417 = vmatpush.bf16.xpose.msra.mxu0 %v387
        %418 = vmatpush.bf16.xpose.msra.mxu0 %v384
        %419 = vmatpush.bf16.xpose.msra.mxu0 %v381
        %420 = vmatpush.bf16.xpose.msra.mxu0 %v378
        %421 = vmatpush.bf16.xpose.msra.mxu0 %v375
        %422 = vmatpush.bf16.xpose.msra.mxu0 %v372
        %423 = vmatpush.bf16.xpose.msra.mxu0 %v369
        %424 = vmatmul.bf16.gmra.mxu0 %v363
        %v425 = vpop.f32.mrf.mxu0
        %v426 = vadd.f32 %v254, %v425
        %v427 = vpop.f32.mrf.mxu0
        %v428 = vadd.f32 %v259, %v427
        %429 = vmatmul.bf16.gmra.mxu0 %v366
        %v430 = vpop.f32.mrf.mxu0
        %v431 = vadd.f32 %v264, %v430
        %v432 = vpop.f32.mrf.mxu0
        %v433 = vadd.f32 %v269, %v432
        %434 = vdwg.mxu0
        %435 = vmatpush.bf16.xpose.msra.mxu0 %v414
        %436 = vmatpush.bf16.xpose.msra.mxu0 %v411
        %437 = vmatpush.bf16.xpose.msra.mxu0 %v408
        %438 = vmatpush.bf16.xpose.msra.mxu0 %v405
        %439 = vmatpush.bf16.xpose.msra.mxu0 %v402
        %440 = vmatpush.bf16.xpose.msra.mxu0 %v399
        %441 = vmatpush.bf16.xpose.msra.mxu0 %v396
        %442 = vmatpush.bf16.xpose.msra.mxu0 %v393
        %443 = vmatmul.bf16.gmra.mxu0 %v363
        %v444 = vpop.f32.mrf.mxu0
        %v445 = vadd.f32 %v254, %v444
        %v446 = vpop.f32.mrf.mxu0
        %v447 = vadd.f32 %v259, %v446
        %448 = vmatmul.bf16.gmra.mxu0 %v366
        %v449 = vpop.f32.mrf.mxu0
        %v450 = vadd.f32 %v264, %v449
        %v451 = vpop.f32.mrf.mxu0
        %v452 = vadd.f32 %v269, %v451
        %453 = vdwg.mxu0
        %v454 = vmul.f32 %v426, 0.5
        %v455 = vmul.f32 %v445, 0.5
        %v456 = vmul.f32 %v428, 0.5
        %v457 = vmul.f32 %v447, 0.5
        %v458 = vmul.f32 %v431, 0.5
        %v459 = vmul.f32 %v450, 0.5
        %v460 = vmul.f32 %v433, 0.5
        %v461 = vmul.f32 %v452, 0.5
        %v462 = vtanh.pop %v454
        %v463 = vtanh.pop %v455
        %v464 = vtanh.pop %v456
        %v465 = vtanh.pop %v457
        %v466 = vtanh.pop %v458
        %v467 = vtanh.pop %v459
        %v468 = vtanh.pop %v460
        %v469 = vtanh.pop %v461
        %v470 = vadd.f32 %v462, 1.0
        %v471 = vadd.f32 %v463, 1.0
        %v472 = vadd.f32 %v464, 1.0
        %v473 = vadd.f32 %v465, 1.0
        %v474 = vadd.f32 %v466, 1.0
        %v475 = vadd.f32 %v467, 1.0
        %v476 = vadd.f32 %v468, 1.0
        %v477 = vadd.f32 %v469, 1.0
        %v478 = vmul.f32 %v470, 0.5
        %v479 = vmul.f32 %v471, 0.5
        %v480 = vmul.f32 %v472, 0.5
        %v481 = vmul.f32 %v473, 0.5
        %v482 = vmul.f32 %v474, 0.5
        %v483 = vmul.f32 %v475, 0.5
        %v484 = vmul.f32 %v476, 0.5
        %v485 = vmul.f32 %v477, 0.5
        %s486 = smul.u32 %s22, 256
        %s487 = scvt.s32.f32 %s486
        %v488 = vlaneseq
        %v489 = vand.u32 %v488, 127
        %v490 = vadd.s32 %v489, 128
        %v491 = vcvt.s32.f32 %v489
        %v492 = vcvt.s32.f32 %v490
        %v493 = vstv %s487
        %v494 = vadd.f32 %v491, %v493
        %v495 = vadd.f32 %v492, %v493
        %v496 = vadd.f32 %v494, 0.5
        %v497 = vadd.f32 %v495, 0.5
        %v498 = vrcp.pop 256.0
        %v499 = vmul.f32 256.0, %v498
        %v500 = vsub.f32 1.0, %v499
        %v501 = vmul.f32 %v498, %v500
        %v502 = vadd.f32 %v498, %v501
        %vm503 = vweird.f32 %v498
        %v504 = vsel %vm503, %v498, %v502
        %v505 = vmul.f32 %v496, %v504
        %v506 = vmul.f32 %v497, %v504
        %v507 = vfloor.f32 %v505
        %v508 = vfloor.f32 %v506
        %v509 = vmul.f32 %v507, 256.0
        %v510 = vmul.f32 %v508, 256.0
        %v511 = vsub.f32 %v494, %v509
        %v512 = vsub.f32 %v495, %v510
        %v513 = vadd.f32 %v511, 0.5
        %v514 = vadd.f32 %v512, 0.5
        %v515 = vrcp.pop 16.0
        %v516 = vmul.f32 16.0, %v515
        %v517 = vsub.f32 1.0, %v516
        %v518 = vmul.f32 %v515, %v517
        %v519 = vadd.f32 %v515, %v518
        %vm520 = vweird.f32 %v515
        %v521 = vsel %vm520, %v515, %v519
        %v522 = vmul.f32 %v513, %v521
        %v523 = vmul.f32 %v514, %v521
        %v524 = vfloor.f32 %v522
        %v525 = vfloor.f32 %v523
        %v526 = vmul.f32 %v524, 16.0
        %v527 = vmul.f32 %v525, 16.0
        %v528 = vsub.f32 %v511, %v526
        %v529 = vsub.f32 %v512, %v527
        %v530 = vsub.f32 %v528, 0.5
        %v531 = vsub.f32 %v529, 0.5
        %v532 = vsub.f32 %v524, 0.5
        %v533 = vsub.f32 %v525, 0.5
        %534 = vset.pattern.permute.xlu0 2
        %535 = vperm.xlu0 %534, %v247
        %v536 = vpop.permute.xlu0 %535
        %538 = vset.pattern.permute.xlu0 2
        %539 = vperm.xlu0 %538, %v248
        %v540 = vpop.permute.xlu0 %539
        %542 = vset.pattern.permute.xlu0 2
        %543 = vperm.xlu0 %542, %v249
        %v544 = vpop.permute.xlu0 %543
        %546 = vset.pattern.permute.xlu0 2
        %547 = vperm.xlu0 %546, %v250
        %v548 = vpop.permute.xlu0 %547
        %v550 = vmul.f32 %v478, %v536
        %v551 = vmul.f32 %v479, %v536
        %v552 = vmul.f32 %v480, %v540
        %v553 = vmul.f32 %v481, %v540
        %v554 = vmul.f32 %v482, %v544
        %v555 = vmul.f32 %v483, %v544
        %v556 = vmul.f32 %v484, %v548
        %v557 = vmul.f32 %v485, %v548
        %558 = vset.pattern.permute.xlu0 1
        %559 = vperm.xlu0 %558, %v247
        %v560 = vpop.permute.xlu0 %559
        %562 = vset.pattern.permute.xlu0 1
        %563 = vperm.xlu0 %562, %v248
        %v564 = vpop.permute.xlu0 %563
        %566 = vset.pattern.permute.xlu0 1
        %567 = vperm.xlu0 %566, %v249
        %v568 = vpop.permute.xlu0 %567
        %570 = vset.pattern.permute.xlu0 1
        %571 = vperm.xlu0 %570, %v250
        %v572 = vpop.permute.xlu0 %571
        %v574 = vadd.f32 %v560, %v550
        %v575 = vadd.f32 %v560, %v551
        %v576 = vadd.f32 %v564, %v552
        %v577 = vadd.f32 %v564, %v553
        %v578 = vadd.f32 %v568, %v554
        %v579 = vadd.f32 %v568, %v555
        %v580 = vadd.f32 %v572, %v556
        %v581 = vadd.f32 %v572, %v557
        %v582 = vmul.f32 %v478, %v574
        %v583 = vmul.f32 %v479, %v575
        %v584 = vmul.f32 %v480, %v576
        %v585 = vmul.f32 %v481, %v577
        %v586 = vmul.f32 %v482, %v578
        %v587 = vmul.f32 %v483, %v579
        %v588 = vmul.f32 %v484, %v580
        %v589 = vmul.f32 %v485, %v581
        %590 = vset.pattern.permute.xlu0 3
        %591 = vperm.xlu0 %590, %v247
        %v592 = vpop.permute.xlu0 %591
        %594 = vset.pattern.permute.xlu0 3
        %595 = vperm.xlu0 %594, %v248
        %v596 = vpop.permute.xlu0 %595
        %598 = vset.pattern.permute.xlu0 3
        %599 = vperm.xlu0 %598, %v249
        %v600 = vpop.permute.xlu0 %599
        %602 = vset.pattern.permute.xlu0 3
        %603 = vperm.xlu0 %602, %v250
        %v604 = vpop.permute.xlu0 %603
        %v606 = vmul.f32 %v530, %v592
        %v607 = vmul.f32 %v531, %v592
        %v608 = vmul.f32 %v530, %v596
        %v609 = vmul.f32 %v531, %v596
        %v610 = vmul.f32 %v530, %v600
        %v611 = vmul.f32 %v531, %v600
        %v612 = vmul.f32 %v530, %v604
        %v613 = vmul.f32 %v531, %v604
        %v614 = vadd.f32 %v582, %v606
        %v615 = vadd.f32 %v583, %v607
        %v616 = vadd.f32 %v584, %v608
        %v617 = vadd.f32 %v585, %v609
        %v618 = vadd.f32 %v586, %v610
        %v619 = vadd.f32 %v587, %v611
        %v620 = vadd.f32 %v588, %v612
        %v621 = vadd.f32 %v589, %v613
        %622 = vset.pattern.permute.xlu0 4
        %623 = vperm.xlu0 %622, %v247
        %v624 = vpop.permute.xlu0 %623
        %626 = vset.pattern.permute.xlu0 4
        %627 = vperm.xlu0 %626, %v248
        %v628 = vpop.permute.xlu0 %627
        %630 = vset.pattern.permute.xlu0 4
        %631 = vperm.xlu0 %630, %v249
        %v632 = vpop.permute.xlu0 %631
        %634 = vset.pattern.permute.xlu0 4
        %635 = vperm.xlu0 %634, %v250
        %v636 = vpop.permute.xlu0 %635
        %v638 = vmul.f32 %v532, %v624
        %v639 = vmul.f32 %v533, %v624
        %v640 = vmul.f32 %v532, %v628
        %v641 = vmul.f32 %v533, %v628
        %v642 = vmul.f32 %v532, %v632
        %v643 = vmul.f32 %v533, %v632
        %v644 = vmul.f32 %v532, %v636
        %v645 = vmul.f32 %v533, %v636
        %v646 = vadd.f32 %v614, %v638
        %v647 = vadd.f32 %v615, %v639
        %v648 = vadd.f32 %v616, %v640
        %v649 = vadd.f32 %v617, %v641
        %v650 = vadd.f32 %v618, %v642
        %v651 = vadd.f32 %v619, %v643
        %v652 = vadd.f32 %v620, %v644
        %v653 = vadd.f32 %v621, %v645
        %654 = vst [vmem:[%s195] sm:$0xff] %v426
        %655 = vst [vmem:[%s195 + $0x8] sm:$0xff] %v445
        %656 = vst [vmem:[%s195 + $0x10] sm:$0xff] %v428
        %657 = vst [vmem:[%s195 + $0x18] sm:$0xff] %v447
        %658 = vst [vmem:[%s195 + $0x20] sm:$0xff] %v431
        %659 = vst [vmem:[%s195 + $0x28] sm:$0xff] %v450
        %660 = vst [vmem:[%s195 + $0x30] sm:$0xff] %v433
        %661 = vst [vmem:[%s195 + $0x38] sm:$0xff] %v452
        %662 = vst [vmem:[%s202] sm:$0xff] %v646
        %663 = vst [vmem:[%s202 + $0x8] sm:$0xff] %v647
        %664 = vst [vmem:[%s202 + $0x10] sm:$0xff] %v648
        %665 = vst [vmem:[%s202 + $0x18] sm:$0xff] %v649
        %666 = vst [vmem:[%s202 + $0x20] sm:$0xff] %v650
        %667 = vst [vmem:[%s202 + $0x28] sm:$0xff] %v651
        %668 = vst [vmem:[%s202 + $0x30] sm:$0xff] %v652
        %669 = vst [vmem:[%s202 + $0x38] sm:$0xff] %v653
        %s670 = sand.u32 %s98, 1
        %s671 = scalar_lea.sflag [#allocation3], %s670
        %s672 = sand.u32 %s98, 1
        %s673 = smul.addr %s672, 64
        %s674 = scalar_lea.vmem [#allocation2], %s673
        %s675 = sand.u32 %s124, 1
        %s676 = scalar_lea.sflag [#allocation5], %s675
        %s677 = sand.u32 %s124, 1
        %s678 = smul.addr %s677, 64
        %s679 = scalar_lea.vmem [#allocation4], %s678
        // Predicated region
        $region33: #{tpu_custom_call.1} parent=31 // pred_check
          %p680 = pneg %p108
        $region34: #{tpu_custom_call.1} parent=31 // pred_check_branch
          %682 = sbr.rel (%p680) target = $region36
        $region35: #{tpu_custom_call.1} parent=31 // pred_region
          %s683 = smul.u32 2, %s22
          %685 = vsyncadd %s671, 0
          %s686 = smul.addr %s683, 8
          %s687 = scalar_lea.hbm %s3, %s686
          %s688 = sshll.u32 %s674, 4
          %s689 = int_to_ptr.vmem [resolvable:$true] %s688
          %s690 = sshll.u32 %s687, 4
          %s691 = int_to_ptr.hbm [resolvable:$true] %s690
          %696 = dma.vmem_to_hbm [thread:$0]  %s689, 1024, %s691, %s671, 256, 512, 16
        $region36: #{tpu_custom_call.1} parent=31 // pred_fallthru
          _
        // Predicated region
        $region37: #{tpu_custom_call.1} parent=31 // pred_check
          %p697 = pneg %p134
        $region38: #{tpu_custom_call.1} parent=31 // pred_check_branch
          %699 = sbr.rel (%p697) target = $region40
        $region39: #{tpu_custom_call.1} parent=31 // pred_region
          %s700 = smul.u32 2, %s22
          %702 = vsyncadd %s676, 0
          %s703 = smul.addr %s700, 8
          %s704 = scalar_lea.hbm %s4, %s703
          %s705 = sshll.u32 %s679, 4
          %s706 = int_to_ptr.vmem [resolvable:$true] %s705
          %s707 = sshll.u32 %s704, 4
          %s708 = int_to_ptr.hbm [resolvable:$true] %s707
          %713 = dma.vmem_to_hbm [thread:$0]  %s706, 1024, %s708, %s676, 256, 512, 16
        $region40: #{tpu_custom_call.1} parent=31 // pred_fallthru
          _
      $region32: #{tpu_custom_call.1} parent=5 // pred_fallthru
        _
      %p714 = scmp.le.s32.totalorder 2, %s17
      // Predicated region
      $region41: #{tpu_custom_call.1} parent=5 // pred_check
        %p715 = pneg %p714
      $region42: #{tpu_custom_call.1} parent=5 // pred_check_branch
        %717 = sbr.rel (%p715) target = $region44
      $region43: #{tpu_custom_call.1} parent=5 // pred_region
        %s718 = ssub.s32 %s17, 2
        // Predicated region
        $region45: #{tpu_custom_call.1} parent=43 // pred_check
          %p719 = pneg %p114
        $region46: #{tpu_custom_call.1} parent=43 // pred_check_branch
          %721 = sbr.rel (%p719) target = $region48
        $region47: #{tpu_custom_call.1} parent=43 // pred_region
          %s722 = sand.u32 %s99, 1
          %s723 = scalar_lea.sflag [#allocation3], %s722
          %s724 = sand.u32 %s99, 1
          %s725 = smul.addr %s724, 64
          %s726 = scalar_lea.vmem [#allocation2], %s725
          %728 = dma.done %s723, 1024
        $region48: #{tpu_custom_call.1} parent=43 // pred_fallthru
          _
        // Predicated region
        $region49: #{tpu_custom_call.1} parent=43 // pred_check
          %p729 = pneg %p140
        $region50: #{tpu_custom_call.1} parent=43 // pred_check_branch
          %731 = sbr.rel (%p729) target = $region52
        $region51: #{tpu_custom_call.1} parent=43 // pred_region
          %s732 = sand.u32 %s125, 1
          %s733 = scalar_lea.sflag [#allocation5], %s732
          %s734 = sand.u32 %s125, 1
          %s735 = smul.addr %s734, 64
          %s736 = scalar_lea.vmem [#allocation4], %s735
          %738 = dma.done %s733, 1024
        $region52: #{tpu_custom_call.1} parent=43 // pred_fallthru
          _
      $region44: #{tpu_custom_call.1} parent=5 // pred_fallthru
        _
    $region6: #{tpu_custom_call.1} parent=1 // loop_footer
      %s21 = sadd.s32 1, %s17
    $region7: #{tpu_custom_call.1} parent=1 // loop_footer_branch
      %16 = sbr.rel target = $region3
    $region8: #{tpu_custom_call.1} parent=1 // loop_exit
      _
    %739 = vsyncpa [#allocation3], 1
    %s740 = scalar_lea.sflag [#allocation3], 1
    %741 = vsyncpa %s740, 1
    %742 = vsyncpa [#allocation5], 1
    %s743 = scalar_lea.sflag [#allocation5], 1
    %744 = vsyncpa %s743, 1

</llo_original>
